<compile_context>
chip_gen: v6e
topology: v6e:2x2x1
jax: 0.10.0
libtpu: 0.0.40
codegen_flags: <defaults>
</compile_context>

<pallas_src>
import jax
import jax.numpy as jnp
from jax.experimental import pallas as pl
from jax.experimental.pallas import tpu as pltpu


# ----------------------------------------------------------------------------
# helpers
# ----------------------------------------------------------------------------
def _mm(x, w, use_bf16):
    """Matmul with optional bf16 inputs; always accumulates in f32."""
    if use_bf16:
        x = x.astype(jnp.bfloat16)
        w = w.astype(jnp.bfloat16)
    return jnp.dot(x, w, preferred_element_type=jnp.float32)


def _pick_batch_tile(B, N, max_rows=4096):
    """Largest divisor Bt of B with Bt*N <= max_rows (fills the MXU M dim,
    bounded so activations stay comfortably inside scoped VMEM)."""
    best = 1
    for d in range(1, B + 1):
        if B % d == 0 and d * N <= max_rows:
            best = d
    return best


# ----------------------------------------------------------------------------
# Stage 1 kernel: grid_mapped = map(grid)   (batch-invariant, computed once)
# ----------------------------------------------------------------------------
def _make_map_kernel(n_layers, d_in_first, use_bf16):
    def kernel(*refs):
        g_ref = refs[0]                                      # (N, Dg)
        params = [(refs[1 + 2 * i], refs[2 + 2 * i]) for i in range(n_layers)]
        out_ref = refs[1 + 2 * n_layers]                     # (N, C)

        x = g_ref[...]                                       # f32 (N, Dg)
        for i, (w_ref, b_ref) in enumerate(params):
            w = w_ref[...]
            b = b_ref[...]                                   # (1, H)
            if i == 0 and d_in_first <= 8:
                # K is tiny (2 for a planar folding grid): do the "matmul" as
                # broadcast FMAs on the VPU instead of wasting the 128/256-deep
                # MXU contraction dimension.
                acc = x[:, 0:1] * w[0:1, :]
                for k in range(1, d_in_first):
                    acc = acc + x[:, k:k + 1] * w[k:k + 1, :]
                x = acc + b
            else:
                x = _mm(x, w, use_bf16) + b
            if i < n_layers - 1:
                x = jnp.maximum(x, 0.0)
        out_ref[...] = x.astype(out_ref.dtype)

    return kernel


# ----------------------------------------------------------------------------
# Stage 2 kernel: f = fold(grid_mapped + codeword) [+ grid]
# ----------------------------------------------------------------------------
def _make_fold_kernel(n_layers, res, Bt, N, use_bf16):
    def kernel(*refs):
        idx = 0
        cw_ref = refs[idx]; idx += 1                         # (Bt, 1, C)
        gm_ref = refs[idx]; idx += 1                         # (N, C)
        g_ref = None
        if res:
            g_ref = refs[idx]; idx += 1                      # (N, Dg)
        params = []
        for _ in range(n_layers):
            params.append((refs[idx], refs[idx + 1]))
            idx += 2
        out_ref = refs[idx]                                  # (Bt, N, Dout)

        gm = gm_ref[...]                                     # (N, C)
        cw = cw_ref[...]                                     # (Bt, 1, C)
        x = gm[None, :, :] + cw                              # (Bt, N, C)
        # Flatten batch tile into the row dimension -> one big MXU matmul
        # per layer (fills the M dimension, amortizes per-step overhead).
        x = x.reshape(Bt * N, x.shape[-1])

        for i, (w_ref, b_ref) in enumerate(params):
            x = _mm(x, w_ref[...], use_bf16) + b_ref[...]
            if i < n_layers - 1:
                x = jnp.maximum(x, 0.0)

        f = x.reshape(Bt, N, out_ref.shape[-1])
        if res:
            f = f + g_ref[...][None, :, :]
        out_ref[...] = f.astype(out_ref.dtype)

    return kernel


# ----------------------------------------------------------------------------
# wrapper
# ----------------------------------------------------------------------------
def decoder_forward(codeword, grid, map_params, fold_params, *,
                    res=False, use_bf16=True):
    """Pallas decoder forward.

    codeword    : (B, C) float32
    grid        : (N, Dg) float32
    map_params  : list of (W(Din,Dout), b(Dout,)) for the `map` MLP
    fold_params : list of (W(Din,Dout), b(Dout,)) for the `fold` MLP
    """
    B, C = codeword.shape
    N, Dg = grid.shape
    Cmap = map_params[-1][0].shape[1]
    Dout = fold_params[-1][0].shape[1]
    assert Cmap == C, "map MLP output dim must equal codeword dim"
    if res:
        assert Dout == Dg, "res=True requires fold output dim == grid dim"

    # ----- Stage 1: grid_mapped = map(grid), computed once (batch-invariant)
    map_args = [grid]
    map_specs = [pl.BlockSpec((N, Dg), lambda i: (0, 0))]
    for (w, b) in map_params:
        map_args += [w, b.reshape(1, -1)]
        map_specs += [pl.BlockSpec(w.shape, lambda i: (0, 0)),
                      pl.BlockSpec((1, w.shape[1]), lambda i: (0, 0))]

    grid_mapped = pl.pallas_call(
        _make_map_kernel(len(map_params), Dg, use_bf16),
        out_shape=jax.ShapeDtypeStruct((N, Cmap), jnp.float32),
        grid=(1,),
        in_specs=map_specs,
        out_specs=pl.BlockSpec((N, Cmap), lambda i: (0, 0)),
        compiler_params=pltpu.CompilerParams(
            dimension_semantics=("arbitrary",)),
    )(*map_args)

    # ----- Stage 2: fold(grid_mapped + codeword), tiled over batch
    Bt = _pick_batch_tile(B, N)
    cw3 = codeword.reshape(B, 1, C)

    fold_args = [cw3, grid_mapped]
    fold_specs = [pl.BlockSpec((Bt, 1, C), lambda b: (b, 0, 0)),
                  pl.BlockSpec((N, Cmap), lambda b: (0, 0))]
    if res:
        fold_args.append(grid)
        fold_specs.append(pl.BlockSpec((N, Dg), lambda b: (0, 0)))
    for (w, b) in fold_params:
        fold_args += [w, b.reshape(1, -1)]
        fold_specs += [pl.BlockSpec(w.shape, lambda b: (0, 0)),
                       pl.BlockSpec((1, w.shape[1]), lambda b: (0, 0))]

    out = pl.pallas_call(
        _make_fold_kernel(len(fold_params), res, Bt, N, use_bf16),
        out_shape=jax.ShapeDtypeStruct((B, N, Dout), codeword.dtype),
        grid=(B // Bt,),
        in_specs=fold_specs,
        out_specs=pl.BlockSpec((Bt, N, Dout), lambda b: (b, 0, 0)),
        compiler_params=pltpu.CompilerParams(
            dimension_semantics=("parallel",)),
    )(*fold_args)
    return out


# ----------------------------------------------------------------------------
# pure-JAX reference (mirrors the PyTorch Decoder.forward)
# ----------------------------------------------------------------------------
def _reference_forward(codeword, grid, map_params, fold_params, *, res=False):
    B = codeword.shape[0]
    N = grid.shape[0]
    g = jnp.broadcast_to(grid[None], (B, N, grid.shape[1]))

    def mlp(x, params):
        for i, (w, b) in enumerate(params):
            x = jnp.einsum("bnd,de->bne", x, w) + b
            if i < len(params) - 1:
                x = jnp.maximum(x, 0.0)
        return x

    grid_mapped = mlp(g, map_params)
    f = grid_mapped + codeword[:, None, :]
    f = mlp(f, fold_params)
    if res:
        f = f + g
    return f


def _init_linear(key, d_in, d_out):
    kw, kb = jax.random.split(key)
    w = 0.1 * jax.random.normal(kw, (d_in, d_out), dtype=jnp.float32)
    b = 0.1 * jax.random.normal(kb, (d_out,), dtype=jnp.float32)
    return w, b


if __name__ == "__main__":
    # Small shapes: B=2 batch, N=64 grid points (8x8 plane), codeword C=64.
    B = 2
    C = 64
    map_dims = (2, 32, 64)   # grid (2-D) -> ... -> codeword dim
    fold_dims = (64, 32, 3)  # folded feature -> 3-D points

    key = jax.random.PRNGKey(0)
    k_cw, k_map, k_fold = jax.random.split(key, 3)

    # Folding grid: 8x8 planar lattice in [-1, 1]^2  -> (64, 2)
    lin = jnp.linspace(-1.0, 1.0, 8, dtype=jnp.float32)
    gx, gy = jnp.meshgrid(lin, lin, indexing="ij")
    grid = jnp.stack([gx.ravel(), gy.ravel()], axis=-1)  # (64, 2)

    codeword = jax.random.normal(k_cw, (B, C), dtype=jnp.float32)

    map_keys = jax.random.split(k_map, len(map_dims) - 1)
    map_params = [_init_linear(map_keys[i], map_dims[i], map_dims[i + 1])
                  for i in range(len(map_dims) - 1)]
    fold_keys = jax.random.split(k_fold, len(fold_dims) - 1)
    fold_params = [_init_linear(fold_keys[i], fold_dims[i], fold_dims[i + 1])
                   for i in range(len(fold_dims) - 1)]

    # TODO(synk): FoldingNetSingle source not provided; assumed Linear+ReLU
    # stack with no activation on the final layer (standard FoldingNet).
    ref = _reference_forward(codeword, grid, map_params, fold_params, res=False)

    # f32 path: tight check of kernel structure.
    out_f32 = decoder_forward(codeword, grid, map_params, fold_params,
                              res=False, use_bf16=False)
    out_f32 = jax.block_until_ready(out_f32)
    assert out_f32.shape == (B, grid.shape[0], fold_dims[-1]), out_f32.shape
    assert jnp.allclose(out_f32, ref, rtol=5e-3, atol=5e-3), (
        float(jnp.max(jnp.abs(out_f32 - ref))))

    # bf16-matmul path (f32 accumulation): looser tolerance.
    out_bf16 = decoder_forward(codeword, grid, map_params, fold_params,
                               res=False, use_bf16=True)
    out_bf16 = jax.block_until_ready(out_bf16)
    assert out_bf16.shape == (B, grid.shape[0], fold_dims[-1]), out_bf16.shape
    assert jnp.allclose(out_bf16, ref, rtol=3e-2, atol=3e-2), (
        float(jnp.max(jnp.abs(out_bf16 - ref))))

    print("KERNEL_OK")
</pallas_src>

<mosaic_0001>
module attributes {stable_mosaic.version = 11 : i64} {
  func.func @kernel(%arg0: i32, %arg1: memref<64x2xf32, #tpu.memory_space<vmem>>, %arg2: memref<2x32xf32, #tpu.memory_space<vmem>>, %arg3: memref<1x32xf32, #tpu.memory_space<vmem>>, %arg4: memref<32x64xf32, #tpu.memory_space<vmem>>, %arg5: memref<1x64xf32, #tpu.memory_space<vmem>>, %arg6: memref<64x64xf32, #tpu.memory_space<vmem>>) attributes {dimension_semantics = [#tpu.dimension_semantics<arbitrary>], iteration_bounds = array<i64: 1>, scalar_prefetch = 0 : i64, scratch_operands = 0 : i64, tpu.core_type = #tpu.core_type<tc>, window_params = [{pipeline_mode = #tpu.pipeline_mode<synchronous>, transform_indices = @transform_0, window_bounds = array<i64: 64, 2>}, {pipeline_mode = #tpu.pipeline_mode<synchronous>, transform_indices = @transform_1, window_bounds = array<i64: 2, 32>}, {pipeline_mode = #tpu.pipeline_mode<synchronous>, transform_indices = @transform_2, window_bounds = array<i64: 1, 32>}, {pipeline_mode = #tpu.pipeline_mode<synchronous>, transform_indices = @transform_3, window_bounds = array<i64: 32, 64>}, {pipeline_mode = #tpu.pipeline_mode<synchronous>, transform_indices = @transform_4, window_bounds = array<i64: 1, 64>}, {pipeline_mode = #tpu.pipeline_mode<synchronous>, transform_indices = @transform_5, window_bounds = array<i64: 64, 64>}]} {
    %c0 = arith.constant 0 : index
    %c0_0 = arith.constant 0 : index
    %0 = vector.load %arg1[%c0, %c0_0] : memref<64x2xf32, #tpu.memory_space<vmem>>, vector<64x2xf32>
    %c0_1 = arith.constant 0 : index
    %c0_2 = arith.constant 0 : index
    %1 = vector.load %arg2[%c0_1, %c0_2] : memref<2x32xf32, #tpu.memory_space<vmem>>, vector<2x32xf32>
    %c0_3 = arith.constant 0 : index
    %c0_4 = arith.constant 0 : index
    %2 = vector.load %arg3[%c0_3, %c0_4] : memref<1x32xf32, #tpu.memory_space<vmem>>, vector<1x32xf32>
    %3 = vector.extract_strided_slice %0 {offsets = [0, 0], sizes = [64, 1], strides = [1, 1]} : vector<64x2xf32> to vector<64x1xf32>
    %4 = vector.extract_strided_slice %1 {offsets = [0, 0], sizes = [1, 32], strides = [1, 1]} : vector<2x32xf32> to vector<1x32xf32>
    %5 = vector.broadcast %3 : vector<64x1xf32> to vector<64x32xf32>
    %6 = vector.broadcast %4 : vector<1x32xf32> to vector<64x32xf32>
    %7 = arith.mulf %5, %6 : vector<64x32xf32>
    %8 = vector.extract_strided_slice %0 {offsets = [0, 1], sizes = [64, 1], strides = [1, 1]} : vector<64x2xf32> to vector<64x1xf32>
    %9 = vector.extract_strided_slice %1 {offsets = [1, 0], sizes = [1, 32], strides = [1, 1]} : vector<2x32xf32> to vector<1x32xf32>
    %10 = vector.broadcast %8 : vector<64x1xf32> to vector<64x32xf32>
    %11 = vector.broadcast %9 : vector<1x32xf32> to vector<64x32xf32>
    %12 = arith.mulf %10, %11 : vector<64x32xf32>
    %13 = arith.addf %7, %12 : vector<64x32xf32>
    %14 = vector.broadcast %2 : vector<1x32xf32> to vector<64x32xf32>
    %15 = arith.addf %13, %14 : vector<64x32xf32>
    %cst = arith.constant 0.000000e+00 : f32
    %16 = vector.broadcast %cst : f32 to vector<64x32xf32>
    %17 = arith.maximumf %15, %16 : vector<64x32xf32>
    %c0_5 = arith.constant 0 : index
    %c0_6 = arith.constant 0 : index
    %18 = vector.load %arg4[%c0_5, %c0_6] : memref<32x64xf32, #tpu.memory_space<vmem>>, vector<32x64xf32>
    %c0_7 = arith.constant 0 : index
    %c0_8 = arith.constant 0 : index
    %19 = vector.load %arg5[%c0_7, %c0_8] : memref<1x64xf32, #tpu.memory_space<vmem>>, vector<1x64xf32>
    %cst_9 = arith.constant dense<0.000000e+00> : vector<64x64xf32>
    %20 = tpu.matmul %17, %18, %cst_9 {dimension_numbers = #tpu.dot_dimension_numbers<[1], [0], [0], [1], [0, 0, 1, 1], [], []>} : vector<64x32xf32>, vector<32x64xf32>, vector<64x64xf32> -> vector<64x64xf32>
    %21 = vector.broadcast %19 : vector<1x64xf32> to vector<64x64xf32>
    %22 = arith.addf %20, %21 : vector<64x64xf32>
    %c0_10 = arith.constant 0 : index
    %c0_11 = arith.constant 0 : index
    %23 = vector.load %arg6[%c0_10, %c0_11] : memref<64x64xf32, #tpu.memory_space<vmem>>, vector<64x64xf32>
    tpu.vector_store %arg6[%c0_10, %c0_11], %22 {strides = array<i32>} : memref<64x64xf32, #tpu.memory_space<vmem>>, vector<64x64xf32>,
    return
  }
  func.func @transform_0(%arg0: i32) -> (i32, i32) {
    %c0_i32 = arith.constant 0 : i32
    %c0_i32_0 = arith.constant 0 : i32
    %c0_i32_1 = arith.constant 0 : i32
    return %c0_i32, %c0_i32_0 : i32, i32
  }
  func.func @transform_1(%arg0: i32) -> (i32, i32) {
    %c0_i32 = arith.constant 0 : i32
    %c0_i32_0 = arith.constant 0 : i32
    %c0_i32_1 = arith.constant 0 : i32
    return %c0_i32, %c0_i32_0 : i32, i32
  }
  func.func @transform_2(%arg0: i32) -> (i32, i32) {
    %c0_i32 = arith.constant 0 : i32
    %c0_i32_0 = arith.constant 0 : i32
    %c0_i32_1 = arith.constant 0 : i32
    return %c0_i32, %c0_i32_0 : i32, i32
  }
  func.func @transform_3(%arg0: i32) -> (i32, i32) {
    %c0_i32 = arith.constant 0 : i32
    %c0_i32_0 = arith.constant 0 : i32
    %c0_i32_1 = arith.constant 0 : i32
    return %c0_i32, %c0_i32_0 : i32, i32
  }
  func.func @transform_4(%arg0: i32) -> (i32, i32) {
    %c0_i32 = arith.constant 0 : i32
    %c0_i32_0 = arith.constant 0 : i32
    %c0_i32_1 = arith.constant 0 : i32
    return %c0_i32, %c0_i32_0 : i32, i32
  }
  func.func @transform_5(%arg0: i32) -> (i32, i32) {
    %c0_i32 = arith.constant 0 : i32
    %c0_i32_0 = arith.constant 0 : i32
    %c0_i32_1 = arith.constant 0 : i32
    return %c0_i32, %c0_i32_0 : i32, i32
  }
}

</mosaic_0001>

<llo_original>
// kernel: tpu_custom_call.1
$region0: #{tpu_custom_call.1}
  #allocation0 [shape = 'u32[]', space=smem, size = 0x4, offset = 0x4, fixed_abs, tag = 'smem constant byte address 0x4 - core index']
  #allocation1 [shape = 'u32[144,128]{1,0:T(1,128)}', space=vmem, size = 0x12000, scoped, tag = 'internal scratch']
  %s0 = inlined_call_operand.vmem [shape: f32[64,2], index: 0, kind: input, shape index: {}]
  %s1 = inlined_call_operand.vmem [shape: f32[2,32], index: 1, kind: input, shape index: {}]
  %s2 = inlined_call_operand.vmem [shape: f32[1,32], index: 2, kind: input, shape index: {}]
  %s3 = inlined_call_operand.vmem [shape: f32[32,64], index: 3, kind: input, shape index: {}]
  %s4 = inlined_call_operand.vmem [shape: f32[1,64], index: 4, kind: input, shape index: {}]
  %s5 = inlined_call_operand.hbm [shape: f32[64,64], index: 5, kind: output, shape index: {}]
  %s6 = sld [smem:[#allocation0]]
  $region30: #{tpu_custom_call.1} parent=0
    _
  %s8 = ssub.s32 1, %s6
  %s9 = scalar_select 0, %s8, %s6
  $region1: #{tpu_custom_call.1} parent=0
    #allocation2 [shape = 'u8[32768]{0}', space=vmem, size = 0x8000, scoped, tag = 'output window, operand 0, single buffered']
    #allocation3 [shape = 's32[1]{0}', space=sflag, size = 0x4, scoped, tag = 'scoped memory for tpu_custom_call.1']
    %10 = vsyncpa [#allocation3], 0
    // Predicated region
    $region2: #{tpu_custom_call.1} parent=1 // pred_check
      _
    $region3: #{tpu_custom_call.1} parent=1 // pred_check_branch
      %12 = sbr.rel (0) target = $region5
    $region4: #{tpu_custom_call.1} parent=1 // pred_region
      _
    $region5: #{tpu_custom_call.1} parent=1 // pred_fallthru
      _
    // Predicated region
    $region6: #{tpu_custom_call.1} parent=1 // pred_check
      _
    $region7: #{tpu_custom_call.1} parent=1 // pred_check_branch
      %14 = sbr.rel (0) target = $region9
    $region8: #{tpu_custom_call.1} parent=1 // pred_region
      _
    $region9: #{tpu_custom_call.1} parent=1 // pred_fallthru
      _
    // Predicated region
    $region10: #{tpu_custom_call.1} parent=1 // pred_check
      _
    $region11: #{tpu_custom_call.1} parent=1 // pred_check_branch
      %16 = sbr.rel (0) target = $region13
    $region12: #{tpu_custom_call.1} parent=1 // pred_region
      _
    $region13: #{tpu_custom_call.1} parent=1 // pred_fallthru
      _
    // Predicated region
    $region14: #{tpu_custom_call.1} parent=1 // pred_check
      _
    $region15: #{tpu_custom_call.1} parent=1 // pred_check_branch
      %18 = sbr.rel (0) target = $region17
    $region16: #{tpu_custom_call.1} parent=1 // pred_region
      _
    $region17: #{tpu_custom_call.1} parent=1 // pred_fallthru
      _
    // Predicated region
    $region18: #{tpu_custom_call.1} parent=1 // pred_check
      _
    $region19: #{tpu_custom_call.1} parent=1 // pred_check_branch
      %20 = sbr.rel (0) target = $region21
    $region20: #{tpu_custom_call.1} parent=1 // pred_region
      _
    $region21: #{tpu_custom_call.1} parent=1 // pred_fallthru
      _
    %v21 = vld [vmem:[%s0] sm:$0xff]
    %v22 = vld [vmem:[%s0 + $0x8] sm:$0xff]
    %v23 = vld [vmem:[%s0 + $0x10] sm:$0xff]
    %v24 = vld [vmem:[%s0 + $0x18] sm:$0xff]
    %v25 = vld [vmem:[%s0 + $0x20] sm:$0xff]
    %v26 = vld [vmem:[%s0 + $0x28] sm:$0xff]
    %v27 = vld [vmem:[%s0 + $0x30] sm:$0xff]
    %v28 = vld [vmem:[%s0 + $0x38] sm:$0xff]
    %v29 = vld [vmem:[%s1] sm:$0x3]
    %v30 = vld [vmem:[%s2] sm:$0x1]
    %32 = vset.pattern.permute.xlu0 0
    %33 = vperm.xlu0 %32, %v21
    %v34 = vpop.permute.xlu0 %33
    %37 = vset.pattern.permute.xlu0 0
    %38 = vperm.xlu0 %37, %v22
    %v39 = vpop.permute.xlu0 %38
    %42 = vset.pattern.permute.xlu0 0
    %43 = vperm.xlu0 %42, %v23
    %v44 = vpop.permute.xlu0 %43
    %47 = vset.pattern.permute.xlu0 0
    %48 = vperm.xlu0 %47, %v24
    %v49 = vpop.permute.xlu0 %48
    %52 = vset.pattern.permute.xlu0 0
    %53 = vperm.xlu0 %52, %v25
    %v54 = vpop.permute.xlu0 %53
    %57 = vset.pattern.permute.xlu0 0
    %58 = vperm.xlu0 %57, %v26
    %v59 = vpop.permute.xlu0 %58
    %62 = vset.pattern.permute.xlu0 0
    %63 = vperm.xlu0 %62, %v27
    %v64 = vpop.permute.xlu0 %63
    %67 = vset.pattern.permute.xlu0 0
    %68 = vperm.xlu0 %67, %v28
    %v69 = vpop.permute.xlu0 %68
    %v71 = vlaneseq
    %v72 = vshrl.u32 %v71, 7
    %v73 = vsub.s32 0, %v72
    %v74 = vrot.slane %v29, %v73
    %v75 = vmul.f32 %v34, %v74
    %v76 = vmul.f32 %v39, %v74
    %v77 = vmul.f32 %v44, %v74
    %v78 = vmul.f32 %v49, %v74
    %v79 = vmul.f32 %v54, %v74
    %v80 = vmul.f32 %v59, %v74
    %v81 = vmul.f32 %v64, %v74
    %v82 = vmul.f32 %v69, %v74
    %83 = vset.pattern.permute.xlu0 1
    %84 = vperm.xlu0 %83, %v21
    %v85 = vpop.permute.xlu0 %84
    %87 = vset.pattern.permute.xlu0 1
    %88 = vperm.xlu0 %87, %v22
    %v89 = vpop.permute.xlu0 %88
    %91 = vset.pattern.permute.xlu0 1
    %92 = vperm.xlu0 %91, %v23
    %v93 = vpop.permute.xlu0 %92
    %95 = vset.pattern.permute.xlu0 1
    %96 = vperm.xlu0 %95, %v24
    %v97 = vpop.permute.xlu0 %96
    %99 = vset.pattern.permute.xlu0 1
    %100 = vperm.xlu0 %99, %v25
    %v101 = vpop.permute.xlu0 %100
    %103 = vset.pattern.permute.xlu0 1
    %104 = vperm.xlu0 %103, %v26
    %v105 = vpop.permute.xlu0 %104
    %107 = vset.pattern.permute.xlu0 1
    %108 = vperm.xlu0 %107, %v27
    %v109 = vpop.permute.xlu0 %108
    %111 = vset.pattern.permute.xlu0 1
    %112 = vperm.xlu0 %111, %v28
    %v113 = vpop.permute.xlu0 %112
    %v115 = vlaneseq
    %v116 = vshrl.u32 %v115, 7
    %v117 = vsub.s32 1, %v116
    %v118 = vrot.slane %v29, %v117
    %v119 = vmul.f32 %v85, %v118
    %v120 = vmul.f32 %v89, %v118
    %v121 = vmul.f32 %v93, %v118
    %v122 = vmul.f32 %v97, %v118
    %v123 = vmul.f32 %v101, %v118
    %v124 = vmul.f32 %v105, %v118
    %v125 = vmul.f32 %v109, %v118
    %v126 = vmul.f32 %v113, %v118
    %v127 = vadd.f32 %v75, %v119
    %v128 = vadd.f32 %v76, %v120
    %v129 = vadd.f32 %v77, %v121
    %v130 = vadd.f32 %v78, %v122
    %v131 = vadd.f32 %v79, %v123
    %v132 = vadd.f32 %v80, %v124
    %v133 = vadd.f32 %v81, %v125
    %v134 = vadd.f32 %v82, %v126
    %v136 = vlaneseq
    %v137 = vshrl.u32 %v136, 7
    %v138 = vsub.s32 0, %v137
    %v139 = vrot.slane %v30, %v138
    %v141 = vadd.f32 %v127, %v139
    %v142 = vadd.f32 %v128, %v139
    %v143 = vadd.f32 %v129, %v139
    %v144 = vadd.f32 %v130, %v139
    %v145 = vadd.f32 %v131, %v139
    %v146 = vadd.f32 %v132, %v139
    %v147 = vadd.f32 %v133, %v139
    %v148 = vadd.f32 %v134, %v139
    %v149 = vmax.f32 %v141, 0.0
    %v150 = vmax.f32 %v142, 0.0
    %v151 = vmax.f32 %v143, 0.0
    %v152 = vmax.f32 %v144, 0.0
    %v153 = vmax.f32 %v145, 0.0
    %v154 = vmax.f32 %v146, 0.0
    %v155 = vmax.f32 %v147, 0.0
    %v156 = vmax.f32 %v148, 0.0
    %v157 = vld [vmem:[%s3] sm:$0xff]
    %v158 = vld [vmem:[%s3 + $0x8] sm:$0xff]
    %v159 = vld [vmem:[%s3 + $0x10] sm:$0xff]
    %v160 = vld [vmem:[%s3 + $0x18] sm:$0xff]
    %v161 = vld [vmem:[%s4] sm:$0x1]
    %v163 = vlaneseq
    %v164 = vshrl.u32 %v163, 7
    %v165 = vsub.s32 0, %v164
    %v166 = vrot.slane %v161, %v165
    %vm168 = vcmask 261120
    %v170 = vsel %vm168, %v149, 0
    %v173 = vsel %vm168, %v150, 0
    %v176 = vsel %vm168, %v151, 0
    %v179 = vsel %vm168, %v152, 0
    %v182 = vsel %vm168, %v153, 0
    %v185 = vsel %vm168, %v154, 0
    %v188 = vsel %vm168, %v155, 0
    %v191 = vsel %vm168, %v156, 0
    %193 = vmatprep.subr.mxu0 0.0
    %194 = vmatpush1.msra.mxu0 0.0
    %195 = vmatprep.subr.mxu0 0.0
    %196 = vmatpush1.msra.mxu0 0.0
    %197 = vmatprep.subr.mxu0 0.0
    %198 = vmatpush1.msra.mxu0 0.0
    %199 = vmatprep.subr.mxu0 0.0
    %200 = vmatpush1.msra.mxu0 0.0
    %201 = vmatprep.subr.mxu0 0.0
    %202 = vmatpush1.msra.mxu0 0.0
    %203 = vmatprep.subr.mxu0 0.0
    %204 = vmatpush1.msra.mxu0 0.0
    %205 = vmatprep.subr.mxu0 0.0
    %206 = vmatpush1.msra.mxu0 0.0
    %207 = vmatprep.subr.mxu0 0.0
    %208 = vmatpush1.msra.mxu0 0.0
    %209 = vmatprep.subr.mxu0 0.0
    %210 = vmatpush1.msra.mxu0 0.0
    %211 = vmatprep.subr.mxu0 0.0
    %212 = vmatpush1.msra.mxu0 0.0
    %213 = vmatprep.subr.mxu0 0.0
    %214 = vmatpush1.msra.mxu0 0.0
    %215 = vmatprep.subr.mxu0 0.0
    %216 = vmatpush1.msra.mxu0 0.0
    %217 = vmatprep.subr.mxu0 0.0
    %218 = vmatpush1.msra.mxu0 %v160
    %219 = vmatprep.subr.mxu0 0.0
    %220 = vmatpush1.msra.mxu0 %v159
    %221 = vmatprep.subr.mxu0 0.0
    %222 = vmatpush1.msra.mxu0 %v158
    %223 = vmatprep.subr.mxu0 0.0
    %224 = vmatpush1.msra.mxu0 %v157
    %225 = vmatprep.subr.mxu0 0.0
    %226 = vmatpush2.msra.mxu0 0.0
    %227 = vmatprep.subr.mxu0 0.0
    %228 = vmatpush2.msra.mxu0 0.0
    %229 = vmatprep.subr.mxu0 0.0
    %230 = vmatpush2.msra.mxu0 0.0
    %231 = vmatprep.subr.mxu0 0.0
    %232 = vmatpush2.msra.mxu0 0.0
    %233 = vmatprep.subr.mxu0 0.0
    %234 = vmatpush2.msra.mxu0 0.0
    %235 = vmatprep.subr.mxu0 0.0
    %236 = vmatpush2.msra.mxu0 0.0
    %237 = vmatprep.subr.mxu0 0.0
    %238 = vmatpush2.msra.mxu0 0.0
    %239 = vmatprep.subr.mxu0 0.0
    %240 = vmatpush2.msra.mxu0 0.0
    %241 = vmatprep.subr.mxu0 0.0
    %242 = vmatpush2.msra.mxu0 0.0
    %243 = vmatprep.subr.mxu0 0.0
    %244 = vmatpush2.msra.mxu0 0.0
    %245 = vmatprep.subr.mxu0 0.0
    %246 = vmatpush2.msra.mxu0 0.0
    %247 = vmatprep.subr.mxu0 0.0
    %248 = vmatpush2.msra.mxu0 0.0
    %249 = vmatprep.subr.mxu0 0.0
    %250 = vmatpush2.msra.mxu0 0.0
    %251 = vmatprep.subr.mxu0 0.0
    %252 = vmatpush2.msra.mxu0 0.0
    %253 = vmatprep.subr.mxu0 0.0
    %254 = vmatpush2.msra.mxu0 0.0
    %255 = vmatprep.subr.mxu0 0.0
    %256 = vmatpush2.msra.mxu0 0.0
    %257 = vmatprep.mubr.f32.mxu0 0.0
    %258 = vmatmul.mubr.f32.gmra.mxu0 %v170
    %v259 = vpop.f32.mrf.mxu0
    %v260 = vadd.f32 %v166, %v259
    %v261 = vpop.f32.mrf.mxu0
    %262 = vmatprep.mubr.f32.mxu0 0.0
    %263 = vmatmul.mubr.f32.gmra.mxu0 %v173
    %v264 = vpop.f32.mrf.mxu0
    %v265 = vadd.f32 %v166, %v264
    %v266 = vpop.f32.mrf.mxu0
    %267 = vmatprep.mubr.f32.mxu0 0.0
    %268 = vmatmul.mubr.f32.gmra.mxu0 %v176
    %v269 = vpop.f32.mrf.mxu0
    %v270 = vadd.f32 %v166, %v269
    %v271 = vpop.f32.mrf.mxu0
    %272 = vmatprep.mubr.f32.mxu0 0.0
    %273 = vmatmul.mubr.f32.gmra.mxu0 %v179
    %v274 = vpop.f32.mrf.mxu0
    %v275 = vadd.f32 %v166, %v274
    %v276 = vpop.f32.mrf.mxu0
    %277 = vmatprep.mubr.f32.mxu0 0.0
    %278 = vmatmul.mubr.f32.gmra.mxu0 %v182
    %v279 = vpop.f32.mrf.mxu0
    %v280 = vadd.f32 %v166, %v279
    %v281 = vpop.f32.mrf.mxu0
    %282 = vmatprep.mubr.f32.mxu0 0.0
    %283 = vmatmul.mubr.f32.gmra.mxu0 %v185
    %v284 = vpop.f32.mrf.mxu0
    %v285 = vadd.f32 %v166, %v284
    %v286 = vpop.f32.mrf.mxu0
    %287 = vmatprep.mubr.f32.mxu0 0.0
    %288 = vmatmul.mubr.f32.gmra.mxu0 %v188
    %v289 = vpop.f32.mrf.mxu0
    %v290 = vadd.f32 %v166, %v289
    %v291 = vpop.f32.mrf.mxu0
    %292 = vmatprep.mubr.f32.mxu0 0.0
    %293 = vmatmul.mubr.f32.gmra.mxu0 %v191
    %v294 = vpop.f32.mrf.mxu0
    %v295 = vadd.f32 %v166, %v294
    %v296 = vpop.f32.mrf.mxu0
    %297 = vdwg.mxu0
    %vm298 = vcmask 523264
    %299 = vst.msk [vmem:[#allocation2] sm:$0xff] %vm298, %v260
    %300 = vst.msk [vmem:[#allocation2 + $0x8] sm:$0xff] %vm298, %v265
    %301 = vst.msk [vmem:[#allocation2 + $0x10] sm:$0xff] %vm298, %v270
    %302 = vst.msk [vmem:[#allocation2 + $0x18] sm:$0xff] %vm298, %v275
    %303 = vst.msk [vmem:[#allocation2 + $0x20] sm:$0xff] %vm298, %v280
    %304 = vst.msk [vmem:[#allocation2 + $0x28] sm:$0xff] %vm298, %v285
    %305 = vst.msk [vmem:[#allocation2 + $0x30] sm:$0xff] %vm298, %v290
    %306 = vst.msk [vmem:[#allocation2 + $0x38] sm:$0xff] %vm298, %v295
    // Predicated region
    $region22: #{tpu_custom_call.1} parent=1 // pred_check
      _
    $region23: #{tpu_custom_call.1} parent=1 // pred_check_branch
      %308 = sbr.rel (0) target = $region25
    $region24: #{tpu_custom_call.1} parent=1 // pred_region
      %s310 = ssub.s32 1024, 1024
      %311 = vsyncadd [#allocation3], %s310
      %s312 = sshll.u32 [#allocation2], 4
      %s313 = int_to_ptr.vmem [resolvable:$true] %s312
      %318 = dma.vmem_to_hbm [thread:$0]  %s313, 1024, %s5, [#allocation3], 128, 128, 8
    $region25: #{tpu_custom_call.1} parent=1 // pred_fallthru
      _
    // Predicated region
    $region26: #{tpu_custom_call.1} parent=1 // pred_check
      _
    $region27: #{tpu_custom_call.1} parent=1 // pred_check_branch
      %320 = sbr.rel (0) target = $region29
    $region28: #{tpu_custom_call.1} parent=1 // pred_region
      %321 = dma.done [#allocation3], 1024
    $region29: #{tpu_custom_call.1} parent=1 // pred_fallthru
      _
    %322 = vsyncpa [#allocation3], 1

</llo_original>
